<compile_context>
chip_gen: v7x
topology: tpu7x:2x2x1
jax: 0.10.0
libtpu: 0.0.40
codegen_flags: <defaults>
</compile_context>

<pallas_src>
import functools

import jax
import jax.numpy as jnp
from jax.experimental import pallas as pl
from jax.experimental.pallas import tpu as pltpu


def _mult_channel_linear_kernel(x_ref, w_ref, b_ref, o_ref, *, cb, out_dim):
    """One grid step: `cb` independent per-channel matmuls.

    x_ref: (tb, cb, in_dim)
    w_ref: (cb, in_dim, out_dim)
    b_ref: (cb, out_dim)
    o_ref: (tb, cb*out_dim) -- channel c occupies lanes [c*out_dim, (c+1)*out_dim)
    """
    ys = []
    # Static unroll over the (small) channel block: each iteration is one MXU
    # matmul + a VPU bias add.  Results are concatenated in registers and
    # written back with one wide (lane-dense) store.
    for c in range(cb):
        x_c = x_ref[:, c, :]                               # (tb, in_dim)
        w_c = w_ref[c]                                     # (in_dim, out_dim)
        b_c = b_ref[pl.ds(c, 1), :]                        # (1, out_dim) -> bcast
        y_c = jnp.dot(x_c, w_c, preferred_element_type=jnp.float32) + b_c
        ys.append(y_c)
    y = jnp.concatenate(ys, axis=-1) if cb > 1 else ys[0]  # (tb, cb*out_dim)
    o_ref[...] = y.astype(o_ref.dtype)


def linear_mult_channels(x, weights, biases, *, channels_per_step=None,
                         batch_tile=None):
    """Apply a separate Linear(in_dim, out_dim) to each channel of x.

    x: (B, C, in_dim); weights: (C, in_dim, out_dim); biases: (C, out_dim).
    Returns (B, C, out_dim) == torch.stack([lin_i(x[:, i]) for i], dim=1).
    """
    B, C, in_dim = x.shape
    Cw, in_dim_w, out_dim = weights.shape
    assert (Cw, in_dim_w) == (C, in_dim), "weights shape mismatch"
    assert biases.shape == (C, out_dim), "biases shape mismatch"

    # Default tiling: everything in one grid step (small problems are pure
    # per-step overhead otherwise).  Callers can tile for large shapes.
    cb = C if channels_per_step is None else channels_per_step
    tb = B if batch_tile is None else batch_tile

    # Mosaic (8, 128) legality on the last two dims of every block: a block
    # dim must equal the full array dim or respect the hardware tiling.
    if cb != C:
        assert C % cb == 0 and cb % 8 == 0 and (cb * out_dim) % 128 == 0, (
            "channels_per_step must divide C, be a multiple of 8, and "
            "cb*out_dim must be a multiple of 128")
    if tb != B:
        assert B % tb == 0 and tb % 8 == 0, (
            "batch_tile must divide B and be a multiple of 8")

    grid = (B // tb, C // cb)

    kernel = functools.partial(_mult_channel_linear_kernel, cb=cb,
                               out_dim=out_dim)

    # Output produced as (B, C*out_dim): last dim is as lane-dense as the
    # problem allows; the reshape below is a free row-major view.
    out_flat = pl.pallas_call(
        kernel,
        out_shape=jax.ShapeDtypeStruct((B, C * out_dim), x.dtype),
        grid=grid,
        in_specs=[
            # activations: (tb, cb, in_dim) slab, batch-major -- no transpose
            pl.BlockSpec((tb, cb, in_dim), lambda ib, ic: (ib, ic, 0)),
            # weights: contiguous slab of cb channels' weights
            pl.BlockSpec((cb, in_dim, out_dim), lambda ib, ic: (ic, 0, 0)),
            # biases: one small DMA per channel block
            pl.BlockSpec((cb, out_dim), lambda ib, ic: (ic, 0)),
        ],
        out_specs=pl.BlockSpec((tb, cb * out_dim), lambda ib, ic: (ib, ic)),
        compiler_params=pltpu.CompilerParams(
            dimension_semantics=("parallel", "parallel")),
    )(x, weights, biases)

    return out_flat.reshape(B, C, out_dim)


def _reference(x, weights, biases):
    # Pure-JAX reference of the PyTorch forward.
    return jnp.einsum("bci,cio->bco", x, weights) + biases[None, :, :]


if __name__ == "__main__":
    key = jax.random.PRNGKey(0)
    B, C, in_dim, out_dim = 8, 4, 32, 16

    kx, kw, kb = jax.random.split(key, 3)
    x = jax.random.normal(kx, (B, C, in_dim), dtype=jnp.float32)
    # Deterministic synthetic parameters: one Linear per channel.
    weights = jax.random.normal(kw, (C, in_dim, out_dim), dtype=jnp.float32) * 0.1
    biases = jax.random.normal(kb, (C, out_dim), dtype=jnp.float32) * 0.1

    y = linear_mult_channels(x, weights, biases)
    y = jax.block_until_ready(y)

    y_ref = _reference(x, weights, biases)
    assert y.shape == (B, C, out_dim)
    assert jnp.allclose(y, y_ref, atol=1e-5, rtol=1e-5)

    print("KERNEL_OK")
</pallas_src>

<mosaic_0001>
module attributes {stable_mosaic.version = 11 : i64} {
  func.func @_mult_channel_linear_kernel(%arg0: i32, %arg1: i32, %arg2: memref<8x4x32xf32, #tpu.memory_space<vmem>>, %arg3: memref<4x32x16xf32, #tpu.memory_space<vmem>>, %arg4: memref<4x16xf32, #tpu.memory_space<vmem>>, %arg5: memref<8x64xf32, #tpu.memory_space<vmem>>) attributes {dimension_semantics = [#tpu.dimension_semantics<parallel>, #tpu.dimension_semantics<parallel>], iteration_bounds = array<i64: 1, 1>, scalar_prefetch = 0 : i64, scratch_operands = 0 : i64, tpu.core_type = #tpu.core_type<tc>, window_params = [{transform_indices = @transform_0, window_bounds = array<i64: 8, 4, 32>}, {transform_indices = @transform_1, window_bounds = array<i64: 4, 32, 16>}, {transform_indices = @transform_2, window_bounds = array<i64: 4, 16>}, {transform_indices = @transform_3, window_bounds = array<i64: 8, 64>}]} {
    %c0 = arith.constant 0 : index
    %c0_0 = arith.constant 0 : index
    %c0_1 = arith.constant 0 : index
    %0 = vector.load %arg2[%c0, %c0_0, %c0_1] : memref<8x4x32xf32, #tpu.memory_space<vmem>>, vector<8x1x32xf32>
    %1 = vector.shape_cast %0 : vector<8x1x32xf32> to vector<8x32xf32>
    %c0_2 = arith.constant 0 : index
    %c0_3 = arith.constant 0 : index
    %c0_4 = arith.constant 0 : index
    %2 = vector.load %arg3[%c0_2, %c0_3, %c0_4] : memref<4x32x16xf32, #tpu.memory_space<vmem>>, vector<1x32x16xf32>
    %3 = vector.shape_cast %2 : vector<1x32x16xf32> to vector<32x16xf32>
    %c0_5 = arith.constant 0 : index
    %c0_6 = arith.constant 0 : index
    %4 = vector.load %arg4[%c0_5, %c0_6] : memref<4x16xf32, #tpu.memory_space<vmem>>, vector<1x16xf32>
    %cst = arith.constant dense<0.000000e+00> : vector<8x16xf32>
    %5 = tpu.matmul %1, %3, %cst {dimension_numbers = #tpu.dot_dimension_numbers<[1], [0], [0], [1], [0, 0, 1, 1], [], []>} : vector<8x32xf32>, vector<32x16xf32>, vector<8x16xf32> -> vector<8x16xf32>
    %6 = vector.broadcast %4 : vector<1x16xf32> to vector<8x16xf32>
    %7 = arith.addf %5, %6 : vector<8x16xf32>
    %c0_7 = arith.constant 0 : index
    %c1 = arith.constant 1 : index
    %c0_8 = arith.constant 0 : index
    %8 = vector.load %arg2[%c0_7, %c1, %c0_8] : memref<8x4x32xf32, #tpu.memory_space<vmem>>, vector<8x1x32xf32>
    %9 = vector.shape_cast %8 : vector<8x1x32xf32> to vector<8x32xf32>
    %c1_9 = arith.constant 1 : index
    %c0_10 = arith.constant 0 : index
    %c0_11 = arith.constant 0 : index
    %10 = vector.load %arg3[%c1_9, %c0_10, %c0_11] : memref<4x32x16xf32, #tpu.memory_space<vmem>>, vector<1x32x16xf32>
    %11 = vector.shape_cast %10 : vector<1x32x16xf32> to vector<32x16xf32>
    %c1_12 = arith.constant 1 : index
    %c0_13 = arith.constant 0 : index
    %12 = vector.load %arg4[%c1_12, %c0_13] : memref<4x16xf32, #tpu.memory_space<vmem>>, vector<1x16xf32>
    %cst_14 = arith.constant dense<0.000000e+00> : vector<8x16xf32>
    %13 = tpu.matmul %9, %11, %cst_14 {dimension_numbers = #tpu.dot_dimension_numbers<[1], [0], [0], [1], [0, 0, 1, 1], [], []>} : vector<8x32xf32>, vector<32x16xf32>, vector<8x16xf32> -> vector<8x16xf32>
    %14 = vector.broadcast %12 : vector<1x16xf32> to vector<8x16xf32>
    %15 = arith.addf %13, %14 : vector<8x16xf32>
    %c0_15 = arith.constant 0 : index
    %c2 = arith.constant 2 : index
    %c0_16 = arith.constant 0 : index
    %16 = vector.load %arg2[%c0_15, %c2, %c0_16] : memref<8x4x32xf32, #tpu.memory_space<vmem>>, vector<8x1x32xf32>
    %17 = vector.shape_cast %16 : vector<8x1x32xf32> to vector<8x32xf32>
    %c2_17 = arith.constant 2 : index
    %c0_18 = arith.constant 0 : index
    %c0_19 = arith.constant 0 : index
    %18 = vector.load %arg3[%c2_17, %c0_18, %c0_19] : memref<4x32x16xf32, #tpu.memory_space<vmem>>, vector<1x32x16xf32>
    %19 = vector.shape_cast %18 : vector<1x32x16xf32> to vector<32x16xf32>
    %c2_20 = arith.constant 2 : index
    %c0_21 = arith.constant 0 : index
    %20 = vector.load %arg4[%c2_20, %c0_21] : memref<4x16xf32, #tpu.memory_space<vmem>>, vector<1x16xf32>
    %cst_22 = arith.constant dense<0.000000e+00> : vector<8x16xf32>
    %21 = tpu.matmul %17, %19, %cst_22 {dimension_numbers = #tpu.dot_dimension_numbers<[1], [0], [0], [1], [0, 0, 1, 1], [], []>} : vector<8x32xf32>, vector<32x16xf32>, vector<8x16xf32> -> vector<8x16xf32>
    %22 = vector.broadcast %20 : vector<1x16xf32> to vector<8x16xf32>
    %23 = arith.addf %21, %22 : vector<8x16xf32>
    %c0_23 = arith.constant 0 : index
    %c3 = arith.constant 3 : index
    %c0_24 = arith.constant 0 : index
    %24 = vector.load %arg2[%c0_23, %c3, %c0_24] : memref<8x4x32xf32, #tpu.memory_space<vmem>>, vector<8x1x32xf32>
    %25 = vector.shape_cast %24 : vector<8x1x32xf32> to vector<8x32xf32>
    %c3_25 = arith.constant 3 : index
    %c0_26 = arith.constant 0 : index
    %c0_27 = arith.constant 0 : index
    %26 = vector.load %arg3[%c3_25, %c0_26, %c0_27] : memref<4x32x16xf32, #tpu.memory_space<vmem>>, vector<1x32x16xf32>
    %27 = vector.shape_cast %26 : vector<1x32x16xf32> to vector<32x16xf32>
    %c3_28 = arith.constant 3 : index
    %c0_29 = arith.constant 0 : index
    %28 = vector.load %arg4[%c3_28, %c0_29] : memref<4x16xf32, #tpu.memory_space<vmem>>, vector<1x16xf32>
    %cst_30 = arith.constant dense<0.000000e+00> : vector<8x16xf32>
    %29 = tpu.matmul %25, %27, %cst_30 {dimension_numbers = #tpu.dot_dimension_numbers<[1], [0], [0], [1], [0, 0, 1, 1], [], []>} : vector<8x32xf32>, vector<32x16xf32>, vector<8x16xf32> -> vector<8x16xf32>
    %30 = vector.broadcast %28 : vector<1x16xf32> to vector<8x16xf32>
    %31 = arith.addf %29, %30 : vector<8x16xf32>
    %32 = tpu.concatenate %7, %15, %23, %31 in 1 : vector<8x16xf32>, vector<8x16xf32>, vector<8x16xf32>, vector<8x16xf32> -> vector<8x64xf32>
    %c0_31 = arith.constant 0 : index
    %c0_32 = arith.constant 0 : index
    %33 = vector.load %arg5[%c0_31, %c0_32] : memref<8x64xf32, #tpu.memory_space<vmem>>, vector<8x64xf32>
    tpu.vector_store %arg5[%c0_31, %c0_32], %32 {strides = array<i32>} : memref<8x64xf32, #tpu.memory_space<vmem>>, vector<8x64xf32>,
    return
  }
  func.func @transform_0(%arg0: i32, %arg1: i32) -> (i32, i32, i32) {
    %c0_i32 = arith.constant 0 : i32
    %c0_i32_0 = arith.constant 0 : i32
    return %arg0, %arg1, %c0_i32 : i32, i32, i32
  }
  func.func @transform_1(%arg0: i32, %arg1: i32) -> (i32, i32, i32) {
    %c0_i32 = arith.constant 0 : i32
    %c0_i32_0 = arith.constant 0 : i32
    %c0_i32_1 = arith.constant 0 : i32
    return %arg1, %c0_i32, %c0_i32_0 : i32, i32, i32
  }
  func.func @transform_2(%arg0: i32, %arg1: i32) -> (i32, i32) {
    %c0_i32 = arith.constant 0 : i32
    %c0_i32_0 = arith.constant 0 : i32
    return %arg1, %c0_i32 : i32, i32
  }
  func.func @transform_3(%arg0: i32, %arg1: i32) -> (i32, i32) {
    %c0_i32 = arith.constant 0 : i32
    return %arg0, %arg1 : i32, i32
  }
}

</mosaic_0001>

<llo_original>
// kernel: tpu_custom_call.1
$region0: #{tpu_custom_call.1}
  #allocation0 [shape = 'u32[]', space=smem, size = 0x4, offset = 0x4, fixed_abs, tag = 'smem constant byte address 0x4 - core index']
  #allocation1 [shape = 'u32[144,128]{1,0:T(1,128)}', space=vmem, size = 0x12000, scoped, tag = 'internal scratch']
  %s0 = inlined_call_operand.vmem [shape: f32[8,4,32], index: 0, kind: input, shape index: {}]
  %s1 = inlined_call_operand.vmem [shape: f32[4,32,16], index: 1, kind: input, shape index: {}]
  %s2 = inlined_call_operand.vmem [shape: f32[4,16], index: 2, kind: input, shape index: {}]
  %s3 = inlined_call_operand.hbm [shape: f32[8,64], index: 3, kind: output, shape index: {}]
  %s4 = sld [smem:[#allocation0]]
  $region22: #{tpu_custom_call.1} parent=0
    _
  %s6 = ssub.s32 1, %s4
  %s7 = scalar_select 0, %s6, %s4
  $region1: #{tpu_custom_call.1} parent=0
    #allocation2 [shape = 'u8[4096]{0}', space=vmem, size = 0x1000, scoped, tag = 'output window, operand 0, single buffered']
    #allocation3 [shape = 's32[1]{0}', space=sflag, size = 0x4, scoped, tag = 'scoped memory for tpu_custom_call.1']
    %8 = vsyncpa [#allocation3], 0
    // Predicated region
    $region2: #{tpu_custom_call.1} parent=1 // pred_check
      _
    $region3: #{tpu_custom_call.1} parent=1 // pred_check_branch
      %10 = sbr.rel (0) target = $region5
    $region4: #{tpu_custom_call.1} parent=1 // pred_region
      _
    $region5: #{tpu_custom_call.1} parent=1 // pred_fallthru
      _
    // Predicated region
    $region6: #{tpu_custom_call.1} parent=1 // pred_check
      _
    $region7: #{tpu_custom_call.1} parent=1 // pred_check_branch
      %12 = sbr.rel (0) target = $region9
    $region8: #{tpu_custom_call.1} parent=1 // pred_region
      _
    $region9: #{tpu_custom_call.1} parent=1 // pred_fallthru
      _
    // Predicated region
    $region10: #{tpu_custom_call.1} parent=1 // pred_check
      _
    $region11: #{tpu_custom_call.1} parent=1 // pred_check_branch
      %14 = sbr.rel (0) target = $region13
    $region12: #{tpu_custom_call.1} parent=1 // pred_region
      _
    $region13: #{tpu_custom_call.1} parent=1 // pred_fallthru
      _
    %v15 = vld [vmem:[%s0] sm:$0x1]
    %v16 = vld [vmem:[%s0 + $0x4] sm:$0x1]
    %v17 = vld [vmem:[%s0 + $0x8] sm:$0x1]
    %v18 = vld [vmem:[%s0 + $0xc] sm:$0x1]
    %v19 = vld [vmem:[%s0 + $0x10] sm:$0x1]
    %v20 = vld [vmem:[%s0 + $0x14] sm:$0x1]
    %v21 = vld [vmem:[%s0 + $0x18] sm:$0x1]
    %v22 = vld [vmem:[%s0 + $0x1c] sm:$0x1]
    %v23 = vld [vmem:[%s1] sm:$0xff]
    %v24 = vld [vmem:[%s1 + $0x8] sm:$0xff]
    %v25 = vld [vmem:[%s1 + $0x10] sm:$0xff]
    %v26 = vld [vmem:[%s1 + $0x18] sm:$0xff]
    %v27 = vld [vmem:[%s2] sm:$0x1]
    %v28 = vlaneseq
    %v29 = vshrl.u32 %v28, 7
    %v30 = vsub.s32 0, %v29
    %v31 = vrot.slane %v27, %v30
    %v40 = vrot.slane %v16, 7
    %vm41 = vcmask 1041409
    %v42 = vsel %vm41, %v40, %v15
    %v43 = vrot.slane %v17, 6
    %vm44 = vcmask 1042434
    %v45 = vsel %vm44, %v43, %v42
    %v46 = vrot.slane %v18, 5
    %vm47 = vcmask 1043459
    %v48 = vsel %vm47, %v46, %v45
    %v49 = vrot.slane %v19, 4
    %vm50 = vcmask 1044484
    %v51 = vsel %vm50, %v49, %v48
    %v52 = vrot.slane %v20, 3
    %vm53 = vcmask 1045509
    %v54 = vsel %vm53, %v52, %v51
    %v55 = vrot.slane %v21, 2
    %vm56 = vcmask 1046534
    %v57 = vsel %vm56, %v55, %v54
    %v58 = vrot.slane %v22, 1
    %vm59 = vcmask 1047559
    %v60 = vsel %vm59, %v58, %v57
    %vm61 = vcmask 261120
    %v62 = vsel %vm61, %v60, 0
    %64 = vmatprep.subr.mxu0 0.0
    %65 = vmatpush1.msra.mxu0 %v23
    %66 = vmatprep.subr.mxu0 0.0
    %67 = vmatpush1.msra.mxu0 %v24
    %68 = vmatprep.subr.mxu0 0.0
    %69 = vmatpush1.msra.mxu0 %v25
    %70 = vmatprep.subr.mxu0 0.0
    %71 = vmatpush1.msra.mxu0 %v26
    %72 = vmatprep.subr.mxu0 0.0
    %73 = vmatpush1.msra.mxu0 0.0
    %74 = vmatprep.subr.mxu0 0.0
    %75 = vmatpush1.msra.mxu0 0.0
    %76 = vmatprep.subr.mxu0 0.0
    %77 = vmatpush1.msra.mxu0 0.0
    %78 = vmatprep.subr.mxu0 0.0
    %79 = vmatpush1.msra.mxu0 0.0
    %80 = vmatprep.subr.mxu0 0.0
    %81 = vmatpush1.msra.mxu0 0.0
    %82 = vmatprep.subr.mxu0 0.0
    %83 = vmatpush1.msra.mxu0 0.0
    %84 = vmatprep.subr.mxu0 0.0
    %85 = vmatpush1.msra.mxu0 0.0
    %86 = vmatprep.subr.mxu0 0.0
    %87 = vmatpush1.msra.mxu0 0.0
    %88 = vmatprep.subr.mxu0 0.0
    %89 = vmatpush1.msra.mxu0 0.0
    %90 = vmatprep.subr.mxu0 0.0
    %91 = vmatpush1.msra.mxu0 0.0
    %92 = vmatprep.subr.mxu0 0.0
    %93 = vmatpush1.msra.mxu0 0.0
    %94 = vmatprep.subr.mxu0 0.0
    %95 = vmatpush1.msra.mxu0 0.0
    %96 = vmatprep.subr.mxu0 0.0
    %97 = vmatpush1.msra.mxu0 0.0
    %98 = vmatprep.subr.mxu0 0.0
    %99 = vmatpush1.msra.mxu0 0.0
    %100 = vmatprep.subr.mxu0 0.0
    %101 = vmatpush1.msra.mxu0 0.0
    %102 = vmatprep.subr.mxu0 0.0
    %103 = vmatpush1.msra.mxu0 0.0
    %104 = vmatprep.subr.mxu0 0.0
    %105 = vmatpush1.msra.mxu0 0.0
    %106 = vmatprep.subr.mxu0 0.0
    %107 = vmatpush1.msra.mxu0 0.0
    %108 = vmatprep.subr.mxu0 0.0
    %109 = vmatpush1.msra.mxu0 0.0
    %110 = vmatprep.subr.mxu0 0.0
    %111 = vmatpush1.msra.mxu0 0.0
    %112 = vmatprep.subr.mxu0 0.0
    %113 = vmatpush1.msra.mxu0 0.0
    %114 = vmatprep.subr.mxu0 0.0
    %115 = vmatpush1.msra.mxu0 0.0
    %116 = vmatprep.subr.mxu0 0.0
    %117 = vmatpush1.msra.mxu0 0.0
    %118 = vmatprep.subr.mxu0 0.0
    %119 = vmatpush1.msra.mxu0 0.0
    %120 = vmatprep.subr.mxu0 0.0
    %121 = vmatpush1.msra.mxu0 0.0
    %122 = vmatprep.subr.mxu0 0.0
    %123 = vmatpush1.msra.mxu0 0.0
    %124 = vmatprep.subr.mxu0 0.0
    %125 = vmatpush1.msra.mxu0 0.0
    %126 = vmatprep.subr.mxu0 0.0
    %127 = vmatpush1.msra.mxu0 0.0
    %128 = vmatprep.mubr.f32.mxu0 0.0
    %129 = vmatmul.mubr.f32.gmra.mrb[0].mxu0 %v62
    %v130 = vpop.f32.mrb[0].mxu0
    %v131 = vadd.f32 %v31, %v130
    %v132 = vpop.f32.mrb[0].mxu0
    %133 = vdwg.mxu0
    %v134 = vld [vmem:[%s0 + $0x1] sm:$0x1]
    %v135 = vld [vmem:[%s0 + $0x5] sm:$0x1]
    %v136 = vld [vmem:[%s0 + $0x9] sm:$0x1]
    %v137 = vld [vmem:[%s0 + $0xd] sm:$0x1]
    %v138 = vld [vmem:[%s0 + $0x11] sm:$0x1]
    %v139 = vld [vmem:[%s0 + $0x15] sm:$0x1]
    %v140 = vld [vmem:[%s0 + $0x19] sm:$0x1]
    %v141 = vld [vmem:[%s0 + $0x1d] sm:$0x1]
    %s142 = scalar_lea.vmem %s1, 32
    %v143 = vld [vmem:[%s142] sm:$0xff]
    %v144 = vld [vmem:[%s142 + $0x8] sm:$0xff]
    %v145 = vld [vmem:[%s142 + $0x10] sm:$0xff]
    %v146 = vld [vmem:[%s142 + $0x18] sm:$0xff]
    %v147 = vld [vmem:[%s2 + $0x1] sm:$0x1]
    %v148 = vlaneseq
    %v149 = vshrl.u32 %v148, 7
    %v150 = vsub.s32 0, %v149
    %v151 = vrot.slane %v147, %v150
    %v160 = vrot.slane %v135, 7
    %v161 = vsel %vm41, %v160, %v134
    %v162 = vrot.slane %v136, 6
    %v163 = vsel %vm44, %v162, %v161
    %v164 = vrot.slane %v137, 5
    %v165 = vsel %vm47, %v164, %v163
    %v166 = vrot.slane %v138, 4
    %v167 = vsel %vm50, %v166, %v165
    %v168 = vrot.slane %v139, 3
    %v169 = vsel %vm53, %v168, %v167
    %v170 = vrot.slane %v140, 2
    %v171 = vsel %vm56, %v170, %v169
    %v172 = vrot.slane %v141, 1
    %v173 = vsel %vm59, %v172, %v171
    %v174 = vsel %vm61, %v173, 0
    %176 = vmatprep.subr.mxu0 0.0
    %177 = vmatpush1.msra.mxu0 %v143
    %178 = vmatprep.subr.mxu0 0.0
    %179 = vmatpush1.msra.mxu0 %v144
    %180 = vmatprep.subr.mxu0 0.0
    %181 = vmatpush1.msra.mxu0 %v145
    %182 = vmatprep.subr.mxu0 0.0
    %183 = vmatpush1.msra.mxu0 %v146
    %184 = vmatprep.subr.mxu0 0.0
    %185 = vmatpush1.msra.mxu0 0.0
    %186 = vmatprep.subr.mxu0 0.0
    %187 = vmatpush1.msra.mxu0 0.0
    %188 = vmatprep.subr.mxu0 0.0
    %189 = vmatpush1.msra.mxu0 0.0
    %190 = vmatprep.subr.mxu0 0.0
    %191 = vmatpush1.msra.mxu0 0.0
    %192 = vmatprep.subr.mxu0 0.0
    %193 = vmatpush1.msra.mxu0 0.0
    %194 = vmatprep.subr.mxu0 0.0
    %195 = vmatpush1.msra.mxu0 0.0
    %196 = vmatprep.subr.mxu0 0.0
    %197 = vmatpush1.msra.mxu0 0.0
    %198 = vmatprep.subr.mxu0 0.0
    %199 = vmatpush1.msra.mxu0 0.0
    %200 = vmatprep.subr.mxu0 0.0
    %201 = vmatpush1.msra.mxu0 0.0
    %202 = vmatprep.subr.mxu0 0.0
    %203 = vmatpush1.msra.mxu0 0.0
    %204 = vmatprep.subr.mxu0 0.0
    %205 = vmatpush1.msra.mxu0 0.0
    %206 = vmatprep.subr.mxu0 0.0
    %207 = vmatpush1.msra.mxu0 0.0
    %208 = vmatprep.subr.mxu0 0.0
    %209 = vmatpush1.msra.mxu0 0.0
    %210 = vmatprep.subr.mxu0 0.0
    %211 = vmatpush1.msra.mxu0 0.0
    %212 = vmatprep.subr.mxu0 0.0
    %213 = vmatpush1.msra.mxu0 0.0
    %214 = vmatprep.subr.mxu0 0.0
    %215 = vmatpush1.msra.mxu0 0.0
    %216 = vmatprep.subr.mxu0 0.0
    %217 = vmatpush1.msra.mxu0 0.0
    %218 = vmatprep.subr.mxu0 0.0
    %219 = vmatpush1.msra.mxu0 0.0
    %220 = vmatprep.subr.mxu0 0.0
    %221 = vmatpush1.msra.mxu0 0.0
    %222 = vmatprep.subr.mxu0 0.0
    %223 = vmatpush1.msra.mxu0 0.0
    %224 = vmatprep.subr.mxu0 0.0
    %225 = vmatpush1.msra.mxu0 0.0
    %226 = vmatprep.subr.mxu0 0.0
    %227 = vmatpush1.msra.mxu0 0.0
    %228 = vmatprep.subr.mxu0 0.0
    %229 = vmatpush1.msra.mxu0 0.0
    %230 = vmatprep.subr.mxu0 0.0
    %231 = vmatpush1.msra.mxu0 0.0
    %232 = vmatprep.subr.mxu0 0.0
    %233 = vmatpush1.msra.mxu0 0.0
    %234 = vmatprep.subr.mxu0 0.0
    %235 = vmatpush1.msra.mxu0 0.0
    %236 = vmatprep.subr.mxu0 0.0
    %237 = vmatpush1.msra.mxu0 0.0
    %238 = vmatprep.subr.mxu0 0.0
    %239 = vmatpush1.msra.mxu0 0.0
    %240 = vmatprep.mubr.f32.mxu0 0.0
    %241 = vmatmul.mubr.f32.gmra.mrb[0].mxu0 %v174
    %v242 = vpop.f32.mrb[0].mxu0
    %v243 = vadd.f32 %v151, %v242
    %v244 = vpop.f32.mrb[0].mxu0
    %245 = vdwg.mxu0
    %v246 = vld [vmem:[%s0 + $0x2] sm:$0x1]
    %v247 = vld [vmem:[%s0 + $0x6] sm:$0x1]
    %v248 = vld [vmem:[%s0 + $0xa] sm:$0x1]
    %v249 = vld [vmem:[%s0 + $0xe] sm:$0x1]
    %v250 = vld [vmem:[%s0 + $0x12] sm:$0x1]
    %v251 = vld [vmem:[%s0 + $0x16] sm:$0x1]
    %v252 = vld [vmem:[%s0 + $0x1a] sm:$0x1]
    %v253 = vld [vmem:[%s0 + $0x1e] sm:$0x1]
    %s254 = scalar_lea.vmem %s1, 64
    %v255 = vld [vmem:[%s254] sm:$0xff]
    %v256 = vld [vmem:[%s254 + $0x8] sm:$0xff]
    %v257 = vld [vmem:[%s254 + $0x10] sm:$0xff]
    %v258 = vld [vmem:[%s254 + $0x18] sm:$0xff]
    %v259 = vld [vmem:[%s2 + $0x2] sm:$0x1]
    %v260 = vlaneseq
    %v261 = vshrl.u32 %v260, 7
    %v262 = vsub.s32 0, %v261
    %v263 = vrot.slane %v259, %v262
    %v272 = vrot.slane %v247, 7
    %v273 = vsel %vm41, %v272, %v246
    %v274 = vrot.slane %v248, 6
    %v275 = vsel %vm44, %v274, %v273
    %v276 = vrot.slane %v249, 5
    %v277 = vsel %vm47, %v276, %v275
    %v278 = vrot.slane %v250, 4
    %v279 = vsel %vm50, %v278, %v277
    %v280 = vrot.slane %v251, 3
    %v281 = vsel %vm53, %v280, %v279
    %v282 = vrot.slane %v252, 2
    %v283 = vsel %vm56, %v282, %v281
    %v284 = vrot.slane %v253, 1
    %v285 = vsel %vm59, %v284, %v283
    %v286 = vsel %vm61, %v285, 0
    %288 = vmatprep.subr.mxu0 0.0
    %289 = vmatpush1.msra.mxu0 %v255
    %290 = vmatprep.subr.mxu0 0.0
    %291 = vmatpush1.msra.mxu0 %v256
    %292 = vmatprep.subr.mxu0 0.0
    %293 = vmatpush1.msra.mxu0 %v257
    %294 = vmatprep.subr.mxu0 0.0
    %295 = vmatpush1.msra.mxu0 %v258
    %296 = vmatprep.subr.mxu0 0.0
    %297 = vmatpush1.msra.mxu0 0.0
    %298 = vmatprep.subr.mxu0 0.0
    %299 = vmatpush1.msra.mxu0 0.0
    %300 = vmatprep.subr.mxu0 0.0
    %301 = vmatpush1.msra.mxu0 0.0
    %302 = vmatprep.subr.mxu0 0.0
    %303 = vmatpush1.msra.mxu0 0.0
    %304 = vmatprep.subr.mxu0 0.0
    %305 = vmatpush1.msra.mxu0 0.0
    %306 = vmatprep.subr.mxu0 0.0
    %307 = vmatpush1.msra.mxu0 0.0
    %308 = vmatprep.subr.mxu0 0.0
    %309 = vmatpush1.msra.mxu0 0.0
    %310 = vmatprep.subr.mxu0 0.0
    %311 = vmatpush1.msra.mxu0 0.0
    %312 = vmatprep.subr.mxu0 0.0
    %313 = vmatpush1.msra.mxu0 0.0
    %314 = vmatprep.subr.mxu0 0.0
    %315 = vmatpush1.msra.mxu0 0.0
    %316 = vmatprep.subr.mxu0 0.0
    %317 = vmatpush1.msra.mxu0 0.0
    %318 = vmatprep.subr.mxu0 0.0
    %319 = vmatpush1.msra.mxu0 0.0
    %320 = vmatprep.subr.mxu0 0.0
    %321 = vmatpush1.msra.mxu0 0.0
    %322 = vmatprep.subr.mxu0 0.0
    %323 = vmatpush1.msra.mxu0 0.0
    %324 = vmatprep.subr.mxu0 0.0
    %325 = vmatpush1.msra.mxu0 0.0
    %326 = vmatprep.subr.mxu0 0.0
    %327 = vmatpush1.msra.mxu0 0.0
    %328 = vmatprep.subr.mxu0 0.0
    %329 = vmatpush1.msra.mxu0 0.0
    %330 = vmatprep.subr.mxu0 0.0
    %331 = vmatpush1.msra.mxu0 0.0
    %332 = vmatprep.subr.mxu0 0.0
    %333 = vmatpush1.msra.mxu0 0.0
    %334 = vmatprep.subr.mxu0 0.0
    %335 = vmatpush1.msra.mxu0 0.0
    %336 = vmatprep.subr.mxu0 0.0
    %337 = vmatpush1.msra.mxu0 0.0
    %338 = vmatprep.subr.mxu0 0.0
    %339 = vmatpush1.msra.mxu0 0.0
    %340 = vmatprep.subr.mxu0 0.0
    %341 = vmatpush1.msra.mxu0 0.0
    %342 = vmatprep.subr.mxu0 0.0
    %343 = vmatpush1.msra.mxu0 0.0
    %344 = vmatprep.subr.mxu0 0.0
    %345 = vmatpush1.msra.mxu0 0.0
    %346 = vmatprep.subr.mxu0 0.0
    %347 = vmatpush1.msra.mxu0 0.0
    %348 = vmatprep.subr.mxu0 0.0
    %349 = vmatpush1.msra.mxu0 0.0
    %350 = vmatprep.subr.mxu0 0.0
    %351 = vmatpush1.msra.mxu0 0.0
    %352 = vmatprep.mubr.f32.mxu0 0.0
    %353 = vmatmul.mubr.f32.gmra.mrb[0].mxu0 %v286
    %v354 = vpop.f32.mrb[0].mxu0
    %v355 = vadd.f32 %v263, %v354
    %v356 = vpop.f32.mrb[0].mxu0
    %357 = vdwg.mxu0
    %v358 = vld [vmem:[%s0 + $0x3] sm:$0x1]
    %v359 = vld [vmem:[%s0 + $0x7] sm:$0x1]
    %v360 = vld [vmem:[%s0 + $0xb] sm:$0x1]
    %v361 = vld [vmem:[%s0 + $0xf] sm:$0x1]
    %v362 = vld [vmem:[%s0 + $0x13] sm:$0x1]
    %v363 = vld [vmem:[%s0 + $0x17] sm:$0x1]
    %v364 = vld [vmem:[%s0 + $0x1b] sm:$0x1]
    %v365 = vld [vmem:[%s0 + $0x1f] sm:$0x1]
    %s366 = scalar_lea.vmem %s1, 96
    %v367 = vld [vmem:[%s366] sm:$0xff]
    %v368 = vld [vmem:[%s366 + $0x8] sm:$0xff]
    %v369 = vld [vmem:[%s366 + $0x10] sm:$0xff]
    %v370 = vld [vmem:[%s366 + $0x18] sm:$0xff]
    %v371 = vld [vmem:[%s2 + $0x3] sm:$0x1]
    %v372 = vlaneseq
    %v373 = vshrl.u32 %v372, 7
    %v374 = vsub.s32 0, %v373
    %v375 = vrot.slane %v371, %v374
    %v384 = vrot.slane %v359, 7
    %v385 = vsel %vm41, %v384, %v358
    %v386 = vrot.slane %v360, 6
    %v387 = vsel %vm44, %v386, %v385
    %v388 = vrot.slane %v361, 5
    %v389 = vsel %vm47, %v388, %v387
    %v390 = vrot.slane %v362, 4
    %v391 = vsel %vm50, %v390, %v389
    %v392 = vrot.slane %v363, 3
    %v393 = vsel %vm53, %v392, %v391
    %v394 = vrot.slane %v364, 2
    %v395 = vsel %vm56, %v394, %v393
    %v396 = vrot.slane %v365, 1
    %v397 = vsel %vm59, %v396, %v395
    %v398 = vsel %vm61, %v397, 0
    %400 = vmatprep.subr.mxu0 0.0
    %401 = vmatpush1.msra.mxu0 %v367
    %402 = vmatprep.subr.mxu0 0.0
    %403 = vmatpush1.msra.mxu0 %v368
    %404 = vmatprep.subr.mxu0 0.0
    %405 = vmatpush1.msra.mxu0 %v369
    %406 = vmatprep.subr.mxu0 0.0
    %407 = vmatpush1.msra.mxu0 %v370
    %408 = vmatprep.subr.mxu0 0.0
    %409 = vmatpush1.msra.mxu0 0.0
    %410 = vmatprep.subr.mxu0 0.0
    %411 = vmatpush1.msra.mxu0 0.0
    %412 = vmatprep.subr.mxu0 0.0
    %413 = vmatpush1.msra.mxu0 0.0
    %414 = vmatprep.subr.mxu0 0.0
    %415 = vmatpush1.msra.mxu0 0.0
    %416 = vmatprep.subr.mxu0 0.0
    %417 = vmatpush1.msra.mxu0 0.0
    %418 = vmatprep.subr.mxu0 0.0
    %419 = vmatpush1.msra.mxu0 0.0
    %420 = vmatprep.subr.mxu0 0.0
    %421 = vmatpush1.msra.mxu0 0.0
    %422 = vmatprep.subr.mxu0 0.0
    %423 = vmatpush1.msra.mxu0 0.0
    %424 = vmatprep.subr.mxu0 0.0
    %425 = vmatpush1.msra.mxu0 0.0
    %426 = vmatprep.subr.mxu0 0.0
    %427 = vmatpush1.msra.mxu0 0.0
    %428 = vmatprep.subr.mxu0 0.0
    %429 = vmatpush1.msra.mxu0 0.0
    %430 = vmatprep.subr.mxu0 0.0
    %431 = vmatpush1.msra.mxu0 0.0
    %432 = vmatprep.subr.mxu0 0.0
    %433 = vmatpush1.msra.mxu0 0.0
    %434 = vmatprep.subr.mxu0 0.0
    %435 = vmatpush1.msra.mxu0 0.0
    %436 = vmatprep.subr.mxu0 0.0
    %437 = vmatpush1.msra.mxu0 0.0
    %438 = vmatprep.subr.mxu0 0.0
    %439 = vmatpush1.msra.mxu0 0.0
    %440 = vmatprep.subr.mxu0 0.0
    %441 = vmatpush1.msra.mxu0 0.0
    %442 = vmatprep.subr.mxu0 0.0
    %443 = vmatpush1.msra.mxu0 0.0
    %444 = vmatprep.subr.mxu0 0.0
    %445 = vmatpush1.msra.mxu0 0.0
    %446 = vmatprep.subr.mxu0 0.0
    %447 = vmatpush1.msra.mxu0 0.0
    %448 = vmatprep.subr.mxu0 0.0
    %449 = vmatpush1.msra.mxu0 0.0
    %450 = vmatprep.subr.mxu0 0.0
    %451 = vmatpush1.msra.mxu0 0.0
    %452 = vmatprep.subr.mxu0 0.0
    %453 = vmatpush1.msra.mxu0 0.0
    %454 = vmatprep.subr.mxu0 0.0
    %455 = vmatpush1.msra.mxu0 0.0
    %456 = vmatprep.subr.mxu0 0.0
    %457 = vmatpush1.msra.mxu0 0.0
    %458 = vmatprep.subr.mxu0 0.0
    %459 = vmatpush1.msra.mxu0 0.0
    %460 = vmatprep.subr.mxu0 0.0
    %461 = vmatpush1.msra.mxu0 0.0
    %462 = vmatprep.subr.mxu0 0.0
    %463 = vmatpush1.msra.mxu0 0.0
    %464 = vmatprep.mubr.f32.mxu0 0.0
    %465 = vmatmul.mubr.f32.gmra.mrb[0].mxu0 %v398
    %v466 = vpop.f32.mrb[0].mxu0
    %v467 = vadd.f32 %v375, %v466
    %v468 = vpop.f32.mrb[0].mxu0
    %469 = vdwg.mxu0
    %471 = vrot.lane.b32.xlu0 %v243, 16
    %v472 = vpop.permute.xlu0 %471
    %475 = vrot.lane.b32.xlu0 %v355, 32
    %v476 = vpop.permute.xlu0 %475
    %479 = vrot.lane.b32.xlu0 %v467, 48
    %v480 = vpop.permute.xlu0 %479
    %vm482 = vcmask 130048
    %v483 = vsel %vm482, %v131, %v472
    %v484 = vsel %vm61, %v483, %v476
    %vm485 = vcmask 392192
    %v486 = vsel %vm485, %v484, %v480
    %vm487 = vcmask 523264
    %488 = vst.msk [vmem:[#allocation2] sm:$0xff] %vm487, %v486
    // Predicated region
    $region14: #{tpu_custom_call.1} parent=1 // pred_check
      _
    $region15: #{tpu_custom_call.1} parent=1 // pred_check_branch
      %490 = sbr.rel (0) target = $region17
    $region16: #{tpu_custom_call.1} parent=1 // pred_region
      %s492 = ssub.s32 128, 128
      %493 = vsyncadd [#allocation3], %s492
      %s495 = sshll.u32 [#allocation2], 4
      %s496 = int_to_ptr.vmem [resolvable:$true] %s495
      %498 = dma.vmem_to_hbm [thread:$0]  %s496, 128, %s3, [#allocation3]
    $region17: #{tpu_custom_call.1} parent=1 // pred_fallthru
      _
    // Predicated region
    $region18: #{tpu_custom_call.1} parent=1 // pred_check
      _
    $region19: #{tpu_custom_call.1} parent=1 // pred_check_branch
      %500 = sbr.rel (0) target = $region21
    $region20: #{tpu_custom_call.1} parent=1 // pred_region
      %501 = dma.done [#allocation3], 128
    $region21: #{tpu_custom_call.1} parent=1 // pred_fallthru
      _
    %502 = vsyncpa [#allocation3], 1

</llo_original>
